<compile_context>
chip_gen: v7x
topology: tpu7x:2x2x1
jax: 0.10.0
libtpu: 0.0.40
codegen_flags: <defaults>
</compile_context>

<pallas_src>
import functools

import jax
import jax.numpy as jnp
from jax.experimental import pallas as pl
from jax.experimental.pallas import tpu as pltpu

TAU = 4.0
BETA = 1.0
GAMMA = 1.0
EPS = 1e-8

# Per-grid-step tile budget used to pick TB:
#   2 inputs x 2 pipeline buffers x (TB, C) input dtype  +  ~6 live f32 (TB, C) temps.
_VMEM_TILE_BUDGET = 24 * 1024 * 1024
# Scoped VMEM limit: above the v5e/v6e/v7x defaults, below v7x's 64 MiB physical.
_VMEM_LIMIT_BYTES = 48 * 1024 * 1024


def _dist_kernel(zs_ref, zt_ref, out_ref, *, inv_c):
    inv_tau = 1.0 / TAU

    # --- student branch: reduce to the mean-centered softmax, then let the
    # --- intermediates die before the teacher branch starts (VMEM pressure).
    zs = zs_ref[...].astype(jnp.float32) * inv_tau
    zs = zs - jnp.max(zs, axis=1, keepdims=True)
    es = jnp.exp(zs)
    ys = es * pl.reciprocal(jnp.sum(es, axis=1, keepdims=True), approx=True)
    # softmax rows sum to exactly 1 -> row mean is exactly 1/C (saves 2 XLU
    # reductions per tile vs. jnp.mean).
    a = ys - inv_c

    # --- teacher branch ---
    zt = zt_ref[...].astype(jnp.float32) * inv_tau
    zt = zt - jnp.max(zt, axis=1, keepdims=True)
    et = jnp.exp(zt)
    yt = et * pl.reciprocal(jnp.sum(et, axis=1, keepdims=True), approx=True)
    b = yt - inv_c

    # Per-row Pearson = cosine similarity of the mean-centered rows.
    dot = jnp.sum(a * b, axis=1, keepdims=True)      # (TB, 1)
    na2 = jnp.sum(a * a, axis=1, keepdims=True)      # (TB, 1)
    nb2 = jnp.sum(b * b, axis=1, keepdims=True)      # (TB, 1)
    # sqrt(na2*nb2) == ||a||*||b||; EPS kept in the same place as the reference.
    inv_norm = pl.reciprocal(jnp.sqrt(na2 * nb2) + EPS, approx=True)
    pearson = dot * inv_norm

    # inter_class_relation == intra_class_relation in this module -> fold.
    scale = (BETA + GAMMA) * TAU * TAU
    out_ref[...] = scale * (1.0 - pearson)


def _pick_tile_rows(B, C, in_itemsize):
    """Largest batch-tile that fits the per-step VMEM budget (sublane-aligned)."""
    per_row_bytes = 2 * 2 * C * in_itemsize + 6 * C * 4
    tb = _VMEM_TILE_BUDGET // max(per_row_bytes, 1)
    tb = int(min(tb, B, 1024))
    if tb >= B:
        return B                      # full batch dim: always layout-legal
    return max((tb // 8) * 8, 8)      # partial tiles must be a multiple of 8


def dist_loss(z_s, z_t, *, tile_rows=None):
    """Per-sample DIST loss, shape (B,). Inputs are (B, C) logits."""
    assert z_s.shape == z_t.shape and z_s.ndim == 2
    B, C = z_s.shape
    tb = tile_rows if tile_rows is not None else _pick_tile_rows(
        B, C, jnp.dtype(z_s.dtype).itemsize)
    grid = (pl.cdiv(B, tb),)

    kernel = functools.partial(_dist_kernel, inv_c=float(1.0 / C))
    out = pl.pallas_call(
        kernel,
        out_shape=jax.ShapeDtypeStruct((B, 1), jnp.float32),
        grid_spec=pltpu.PrefetchScalarGridSpec(
            num_scalar_prefetch=0,
            grid=grid,
            in_specs=[
                pl.BlockSpec((tb, C), lambda i: (i, 0)),
                pl.BlockSpec((tb, C), lambda i: (i, 0)),
            ],
            out_specs=pl.BlockSpec((tb, 1), lambda i: (i, 0)),
        ),
        compiler_params=pltpu.CompilerParams(
            # Row tiles are independent -> shard across v7x's 2 TensorCores.
            dimension_semantics=("parallel",),
            vmem_limit_bytes=_VMEM_LIMIT_BYTES,
        ),
    )(z_s, z_t)
    return out[:, 0]  # (B,)


def _reference(z_s, z_t):
    ys = jax.nn.softmax(z_s.astype(jnp.float32) / TAU, axis=1)
    yt = jax.nn.softmax(z_t.astype(jnp.float32) / TAU, axis=1)
    a = ys - ys.mean(axis=1, keepdims=True)
    b = yt - yt.mean(axis=1, keepdims=True)
    cos = (a * b).sum(1) / (jnp.linalg.norm(a, axis=1) *
                            jnp.linalg.norm(b, axis=1) + EPS)
    inter = TAU ** 2 * (1.0 - cos)
    intra = TAU ** 2 * (1.0 - cos)
    return BETA * inter + GAMMA * intra


if __name__ == "__main__":
    key = jax.random.PRNGKey(0)
    k1, k2, k3, k4 = jax.random.split(key, 4)

    # Small case consistent with the module: batch=8 samples, 128 classes.
    B, C = 8, 128
    z_s = jax.random.normal(k1, (B, C), dtype=jnp.float32)
    z_t = jax.random.normal(k2, (B, C), dtype=jnp.float32)
    loss = jax.block_until_ready(dist_loss(z_s, z_t))
    ref = _reference(z_s, z_t)
    assert loss.shape == (B,)
    # Slightly looser tolerance than before: approx (EUP) reciprocals in use.
    assert jnp.allclose(loss, ref, atol=1e-3, rtol=2e-3), (loss, ref)

    # Second small case exercising the multi-tile (pipelined) grid path.
    B2, C2, TB2 = 64, 256, 16
    z_s2 = jax.random.normal(k3, (B2, C2), dtype=jnp.float32)
    z_t2 = jax.random.normal(k4, (B2, C2), dtype=jnp.float32)
    loss2 = jax.block_until_ready(dist_loss(z_s2, z_t2, tile_rows=TB2))
    ref2 = _reference(z_s2, z_t2)
    assert loss2.shape == (B2,)
    assert jnp.allclose(loss2, ref2, atol=1e-3, rtol=2e-3), (loss2, ref2)

    print("KERNEL_OK")
</pallas_src>

<mosaic_0001>
module attributes {stable_mosaic.version = 11 : i64} {
  func.func @_dist_kernel(%arg0: i32, %arg1: memref<8x128xf32, #tpu.memory_space<vmem>>, %arg2: memref<8x128xf32, #tpu.memory_space<vmem>>, %arg3: memref<8x1xf32, #tpu.memory_space<vmem>>) attributes {dimension_semantics = [#tpu.dimension_semantics<parallel>], iteration_bounds = array<i64: 1>, scalar_prefetch = 0 : i64, scratch_operands = 0 : i64, tpu.core_type = #tpu.core_type<tc>, window_params = [{transform_indices = @transform_0, window_bounds = array<i64: 8, 128>}, {transform_indices = @transform_1, window_bounds = array<i64: 8, 128>}, {transform_indices = @transform_2, window_bounds = array<i64: 8, 1>}]} {
    %c0 = arith.constant 0 : index
    %c0_0 = arith.constant 0 : index
    %0 = vector.load %arg1[%c0, %c0_0] : memref<8x128xf32, #tpu.memory_space<vmem>>, vector<8x128xf32>
    %cst = arith.constant 2.500000e-01 : f32
    %1 = vector.broadcast %cst : f32 to vector<8x128xf32>
    %2 = arith.mulf %0, %1 : vector<8x128xf32>
    %cst_1 = arith.constant dense<0xFF800000> : vector<8xf32>
    %3 = vector.multi_reduction <maximumf>, %2, %cst_1 [1] : vector<8x128xf32> to vector<8xf32>
    %4 = vector.shape_cast %3 : vector<8xf32> to vector<8x1xf32>
    %5 = vector.broadcast %4 : vector<8x1xf32> to vector<8x128xf32>
    %6 = arith.subf %2, %5 : vector<8x128xf32>
    %7 = math.exp %6 : vector<8x128xf32>
    %cst_2 = arith.constant dense<0.000000e+00> : vector<8xf32>
    %8 = vector.multi_reduction <add>, %7, %cst_2 [1] : vector<8x128xf32> to vector<8xf32>
    %9 = vector.shape_cast %8 : vector<8xf32> to vector<8x1xf32>
    %10 = tpu.reciprocal %9 {approx = true} : vector<8x1xf32> -> vector<8x1xf32>
    %11 = vector.broadcast %10 : vector<8x1xf32> to vector<8x128xf32>
    %12 = arith.mulf %7, %11 : vector<8x128xf32>
    %cst_3 = arith.constant 7.812500e-03 : f32
    %13 = vector.broadcast %cst_3 : f32 to vector<8x128xf32>
    %14 = arith.subf %12, %13 : vector<8x128xf32>
    %c0_4 = arith.constant 0 : index
    %c0_5 = arith.constant 0 : index
    %15 = vector.load %arg2[%c0_4, %c0_5] : memref<8x128xf32, #tpu.memory_space<vmem>>, vector<8x128xf32>
    %cst_6 = arith.constant 2.500000e-01 : f32
    %16 = vector.broadcast %cst_6 : f32 to vector<8x128xf32>
    %17 = arith.mulf %15, %16 : vector<8x128xf32>
    %cst_7 = arith.constant dense<0xFF800000> : vector<8xf32>
    %18 = vector.multi_reduction <maximumf>, %17, %cst_7 [1] : vector<8x128xf32> to vector<8xf32>
    %19 = vector.shape_cast %18 : vector<8xf32> to vector<8x1xf32>
    %20 = vector.broadcast %19 : vector<8x1xf32> to vector<8x128xf32>
    %21 = arith.subf %17, %20 : vector<8x128xf32>
    %22 = math.exp %21 : vector<8x128xf32>
    %cst_8 = arith.constant dense<0.000000e+00> : vector<8xf32>
    %23 = vector.multi_reduction <add>, %22, %cst_8 [1] : vector<8x128xf32> to vector<8xf32>
    %24 = vector.shape_cast %23 : vector<8xf32> to vector<8x1xf32>
    %25 = tpu.reciprocal %24 {approx = true} : vector<8x1xf32> -> vector<8x1xf32>
    %26 = vector.broadcast %25 : vector<8x1xf32> to vector<8x128xf32>
    %27 = arith.mulf %22, %26 : vector<8x128xf32>
    %cst_9 = arith.constant 7.812500e-03 : f32
    %28 = vector.broadcast %cst_9 : f32 to vector<8x128xf32>
    %29 = arith.subf %27, %28 : vector<8x128xf32>
    %30 = arith.mulf %14, %29 : vector<8x128xf32>
    %cst_10 = arith.constant dense<0.000000e+00> : vector<8xf32>
    %31 = vector.multi_reduction <add>, %30, %cst_10 [1] : vector<8x128xf32> to vector<8xf32>
    %32 = vector.shape_cast %31 : vector<8xf32> to vector<8x1xf32>
    %33 = arith.mulf %14, %14 : vector<8x128xf32>
    %cst_11 = arith.constant dense<0.000000e+00> : vector<8xf32>
    %34 = vector.multi_reduction <add>, %33, %cst_11 [1] : vector<8x128xf32> to vector<8xf32>
    %35 = vector.shape_cast %34 : vector<8xf32> to vector<8x1xf32>
    %36 = arith.mulf %29, %29 : vector<8x128xf32>
    %cst_12 = arith.constant dense<0.000000e+00> : vector<8xf32>
    %37 = vector.multi_reduction <add>, %36, %cst_12 [1] : vector<8x128xf32> to vector<8xf32>
    %38 = vector.shape_cast %37 : vector<8xf32> to vector<8x1xf32>
    %39 = arith.mulf %35, %38 : vector<8x1xf32>
    %40 = math.sqrt %39 : vector<8x1xf32>
    %cst_13 = arith.constant 9.99999993E-9 : f32
    %41 = vector.broadcast %cst_13 : f32 to vector<8x1xf32>
    %42 = arith.addf %40, %41 : vector<8x1xf32>
    %43 = tpu.reciprocal %42 {approx = true} : vector<8x1xf32> -> vector<8x1xf32>
    %44 = arith.mulf %32, %43 : vector<8x1xf32>
    %cst_14 = arith.constant 1.000000e+00 : f32
    %45 = vector.broadcast %cst_14 : f32 to vector<8x1xf32>
    %46 = arith.subf %45, %44 : vector<8x1xf32>
    %cst_15 = arith.constant 3.200000e+01 : f32
    %47 = vector.broadcast %cst_15 : f32 to vector<8x1xf32>
    %48 = arith.mulf %47, %46 : vector<8x1xf32>
    %c0_16 = arith.constant 0 : index
    %c0_17 = arith.constant 0 : index
    %49 = vector.load %arg3[%c0_16, %c0_17] : memref<8x1xf32, #tpu.memory_space<vmem>>, vector<8x1xf32>
    tpu.vector_store %arg3[%c0_16, %c0_17], %48 {strides = array<i32>} : memref<8x1xf32, #tpu.memory_space<vmem>>, vector<8x1xf32>,
    return
  }
  func.func @transform_0(%arg0: i32) -> (i32, i32) {
    %c0_i32 = arith.constant 0 : i32
    %c0_i32_0 = arith.constant 0 : i32
    return %arg0, %c0_i32 : i32, i32
  }
  func.func @transform_1(%arg0: i32) -> (i32, i32) {
    %c0_i32 = arith.constant 0 : i32
    %c0_i32_0 = arith.constant 0 : i32
    return %arg0, %c0_i32 : i32, i32
  }
  func.func @transform_2(%arg0: i32) -> (i32, i32) {
    %c0_i32 = arith.constant 0 : i32
    %c0_i32_0 = arith.constant 0 : i32
    return %arg0, %c0_i32 : i32, i32
  }
}

</mosaic_0001>

<llo_original>
// kernel: tpu_custom_call.1
$region0: #{tpu_custom_call.1}
  #allocation0 [shape = 'u32[]', space=smem, size = 0x4, offset = 0x4, fixed_abs, tag = 'smem constant byte address 0x4 - core index']
  #allocation1 [shape = 'u32[144,128]{1,0:T(1,128)}', space=vmem, size = 0x12000, scoped, tag = 'internal scratch']
  %s0 = inlined_call_operand.hbm [shape: f32[8,128], index: 0, kind: input, shape index: {}]
  %s1 = inlined_call_operand.hbm [shape: f32[8,128], index: 1, kind: input, shape index: {}]
  %s2 = inlined_call_operand.vmem [shape: f32[8,1], index: 2, kind: output, shape index: {}]
  %s3 = sld [smem:[#allocation0]]
  $region26: #{tpu_custom_call.1} parent=0
    _
  %s5 = ssub.s32 1, %s3
  %s6 = scalar_select 0, %s5, %s3
  $region1: #{tpu_custom_call.1} parent=0
    #allocation2 [shape = 'u8[4096]{0}', space=vmem, size = 0x1000, scoped, tag = 'input window, operand 0, single buffered']
    #allocation3 [shape = 's32[1]{0}', space=sflag, size = 0x4, scoped, tag = 'scoped memory for tpu_custom_call.1']
    #allocation4 [shape = 'u8[4096]{0}', space=vmem, size = 0x1000, scoped, tag = 'input window, operand 1, single buffered']
    #allocation5 [shape = 's32[1]{0}', space=sflag, size = 0x4, scoped, tag = 'scoped memory for tpu_custom_call.1']
    %7 = vsyncpa [#allocation3], 0
    %8 = vsyncpa [#allocation5], 0
    // Predicated region
    $region2: #{tpu_custom_call.1} parent=1 // pred_check
      _
    $region3: #{tpu_custom_call.1} parent=1 // pred_check_branch
      %10 = sbr.rel (0) target = $region5
    $region4: #{tpu_custom_call.1} parent=1 // pred_region
      %s12 = ssub.s32 128, 128
      %13 = vsyncadd [#allocation3], %s12
      %s15 = sshll.u32 [#allocation2], 4
      %s16 = int_to_ptr.vmem [resolvable:$true] %s15
      %18 = dma.hbm_to_vmem [thread:$0]  %s0, 128, %s16, [#allocation3]
    $region5: #{tpu_custom_call.1} parent=1 // pred_fallthru
      _
    // Predicated region
    $region6: #{tpu_custom_call.1} parent=1 // pred_check
      _
    $region7: #{tpu_custom_call.1} parent=1 // pred_check_branch
      %20 = sbr.rel (0) target = $region9
    $region8: #{tpu_custom_call.1} parent=1 // pred_region
      %s22 = ssub.s32 128, 128
      %23 = vsyncadd [#allocation5], %s22
      %s25 = sshll.u32 [#allocation4], 4
      %s26 = int_to_ptr.vmem [resolvable:$true] %s25
      %28 = dma.hbm_to_vmem [thread:$0]  %s1, 128, %s26, [#allocation5]
    $region9: #{tpu_custom_call.1} parent=1 // pred_fallthru
      _
    // Predicated region
    $region10: #{tpu_custom_call.1} parent=1 // pred_check
      _
    $region11: #{tpu_custom_call.1} parent=1 // pred_check_branch
      %30 = sbr.rel (0) target = $region13
    $region12: #{tpu_custom_call.1} parent=1 // pred_region
      %31 = dma.done [#allocation3], 128
    $region13: #{tpu_custom_call.1} parent=1 // pred_fallthru
      _
    // Predicated region
    $region14: #{tpu_custom_call.1} parent=1 // pred_check
      _
    $region15: #{tpu_custom_call.1} parent=1 // pred_check_branch
      %33 = sbr.rel (0) target = $region17
    $region16: #{tpu_custom_call.1} parent=1 // pred_region
      %34 = dma.done [#allocation5], 128
    $region17: #{tpu_custom_call.1} parent=1 // pred_fallthru
      _
    %v35 = vld [vmem:[#allocation2] sm:$0xff]
    %v36 = vmul.f32 %v35, 0.25
    %37 = vmax.xlane.f32.xlu0 %v36
    %v38 = vpop.xlane.xlu0 %37
    %v39 = vsub.f32 %v36, %v38
    %v40 = vmul.f32 %v39, 1.442695
    %v41 = vpow.pop %v40
    %42 = vadd.xlane.f32.xlu0 %v41
    %v43 = vpop.xlane.xlu0 %42
    %v44 = vrcp.pop %v43
    %v45 = vmul.f32 %v41, %v44
    %v46 = vsub.f32 %v45, 0.0078125
    %v47 = vld [vmem:[#allocation4] sm:$0xff]
    %v48 = vmul.f32 %v47, 0.25
    %49 = vmax.xlane.f32.xlu0 %v48
    %v50 = vpop.xlane.xlu0 %49
    %v51 = vsub.f32 %v48, %v50
    %v52 = vmul.f32 %v51, 1.442695
    %v53 = vpow.pop %v52
    %54 = vadd.xlane.f32.xlu0 %v53
    %v55 = vpop.xlane.xlu0 %54
    %v56 = vrcp.pop %v55
    %v57 = vmul.f32 %v53, %v56
    %v58 = vsub.f32 %v57, 0.0078125
    %v59 = vmul.f32 %v46, %v58
    %60 = vadd.xlane.f32.xlu0 %v59
    %v61 = vpop.xlane.xlu0 %60
    %v62 = vmul.f32 %v46, %v46
    %63 = vadd.xlane.f32.xlu0 %v62
    %v64 = vpop.xlane.xlu0 %63
    %v65 = vmul.f32 %v58, %v58
    %66 = vadd.xlane.f32.xlu0 %v65
    %v67 = vpop.xlane.xlu0 %66
    %v68 = vmul.f32 %v64, %v67
    %v69 = vrsqrt.pop %v68
    %v70 = vmul.f32 %v68, %v69
    %vm71 = vcmp.eq.f32.partialorder %v68, inf
    %v72 = vsel %vm71, %v68, %v70
    %vm73 = vcmp.eq.f32.partialorder %v68, 0.0
    %v74 = vand.u32 %v68, 2147483648
    %v75 = vsel %vm73, %v74, %v72
    %v76 = vadd.f32 %v75, 1e-08
    %v77 = vrcp.pop %v76
    %v78 = vmul.f32 %v61, %v77
    %v79 = vsub.f32 1.0, %v78
    %v80 = vmul.f32 %v79, 32.0
    %vm81 = vcmask 7168
    %82 = vst.msk [vmem:[%s2] sm:$0xff] %vm81, %v80
    // Predicated region
    $region18: #{tpu_custom_call.1} parent=1 // pred_check
      _
    $region19: #{tpu_custom_call.1} parent=1 // pred_check_branch
      %84 = sbr.rel (0) target = $region21
    $region20: #{tpu_custom_call.1} parent=1 // pred_region
      _
    $region21: #{tpu_custom_call.1} parent=1 // pred_fallthru
      _
    // Predicated region
    $region22: #{tpu_custom_call.1} parent=1 // pred_check
      _
    $region23: #{tpu_custom_call.1} parent=1 // pred_check_branch
      %86 = sbr.rel (0) target = $region25
    $region24: #{tpu_custom_call.1} parent=1 // pred_region
      _
    $region25: #{tpu_custom_call.1} parent=1 // pred_fallthru
      _
    %87 = vsyncpa [#allocation3], 1
    %88 = vsyncpa [#allocation5], 1

</llo_original>
